<compile_context>
chip_gen: v7x
topology: tpu7x:2x2x1
jax: 0.10.0
libtpu: 0.0.40
codegen_flags: <defaults>
</compile_context>

<pallas_src>
import functools

import jax
import jax.numpy as jnp
from jax.experimental import pallas as pl
from jax.experimental.pallas import tpu as pltpu

EPS = 1e-10
TARGET_BLOCK_BYTES = 4 << 20     # ~4 MiB per (TB, M) f32 block (roofline sweet spot)
VMEM_BUDGET_BYTES = 24 << 20     # budget for all in-flight (double-buffered) blocks
VMEM_LIMIT_BYTES = 32 << 20      # explicit scoped-VMEM limit, safe on v5e/v6e/v7x


def _round_up(x: int, m: int) -> int:
    return ((x + m - 1) // m) * m


def _choose_block_batch(B: int, M: int, vmem_budget_bytes: int) -> int:
    """Pick the batch tile TB from a VMEM byte budget.

    Live VMEM per grid step ~= 4 * TB * M * 4 bytes
    (inputs double-buffered + output double-buffered), stats are negligible.
    """
    if B <= 8:
        return B                                   # single full-batch block
    row_bytes = 4 * M
    per_block_cap = min(TARGET_BLOCK_BYTES, vmem_budget_bytes // 4)
    tb = max(8, (per_block_cap // row_bytes) // 8 * 8)
    tb = min(tb, _round_up(B, 8))                  # no bigger than the batch
    # v7x megacore: ensure >= 2 batch tiles so both TensorCores get work.
    tb = min(tb, max(8, _round_up((B + 1) // 2, 8)))
    return tb


def _head_norm_kernel(*refs, widths):
    """Fused concat + inference normalization on one (TB, M) output block.

    refs layout: [x_0..x_{C-1}, mean_0..mean_{C-1}, inv_0..inv_{C-1}, out]
      x_c:    (TB, m_c)  batch tile of component c
      mean_c: (1,  m_c)  running mean slice   (resident across tiles)
      inv_c:  (1,  m_c)  1/sqrt(var + eps)    (resident across tiles)
      out:    (TB, M)    concatenated, normalized features
    """
    C = len(widths)
    x_refs = refs[:C]
    mean_refs = refs[C:2 * C]
    inv_refs = refs[2 * C:3 * C]
    out_ref = refs[3 * C]

    off = 0
    for c in range(C):
        m = widths[c]
        x = x_refs[c][...].astype(jnp.float32)
        out_ref[:, off:off + m] = (x - mean_refs[c][...]) * inv_refs[c][...]
        off += m


def default_head(sim, running_mean, running_var, *, block_batch=None,
                 vmem_budget_bytes=VMEM_BUDGET_BYTES, use_pallas=True):
    """JAX/Pallas equivalent of DefaultHead.forward (online_norm inference).

    sim: dict of arrays with shape (B, m_i) -> returns (B, M), M = sum m_i.
    """
    keys = sorted(sim.keys())
    comps = [jnp.asarray(sim[k]) for k in keys]
    widths = tuple(int(c.shape[-1]) for c in comps)
    B = int(comps[0].shape[0])
    M = int(sum(widths))

    mean = running_mean.reshape(M).astype(jnp.float32)
    var = running_var.reshape(M).astype(jnp.float32)
    inv_std = 1.0 / jnp.sqrt(var + EPS)            # (M,)

    if not use_pallas:
        f = jnp.concatenate([c.astype(jnp.float32) for c in comps], axis=-1)
        return (f - mean[None, :]) * inv_std[None, :]

    # Per-component stat slices, shaped (1, m_i): every kernel load is a full
    # block, and the constant index_map keeps them resident across all tiles.
    means, invs = [], []
    off = 0
    for m in widths:
        means.append(mean[off:off + m].reshape(1, m))
        invs.append(inv_std[off:off + m].reshape(1, m))
        off += m

    if block_batch is not None:
        TB = B if B <= 8 else min(max(8, _round_up(int(block_batch), 8)),
                                  _round_up(B, 8))
    else:
        TB = _choose_block_batch(B, M, vmem_budget_bytes)

    grid = (pl.cdiv(B, TB),)

    in_specs = [pl.BlockSpec((TB, m), lambda i: (i, 0)) for m in widths]
    in_specs += [pl.BlockSpec((1, m), lambda i: (0, 0)) for m in widths]  # means
    in_specs += [pl.BlockSpec((1, m), lambda i: (0, 0)) for m in widths]  # inv_std

    in_bytes = sum(B * m * c.dtype.itemsize for m, c in zip(widths, comps))
    cost = pl.CostEstimate(
        flops=2 * B * M,
        transcendentals=0,
        bytes_accessed=in_bytes + B * M * 4 + 2 * M * 4,
    )

    out = pl.pallas_call(
        functools.partial(_head_norm_kernel, widths=widths),
        grid=grid,
        in_specs=in_specs,
        out_specs=pl.BlockSpec((TB, M), lambda i: (i, 0)),
        out_shape=jax.ShapeDtypeStruct((B, M), jnp.float32),
        compiler_params=pltpu.CompilerParams(
            dimension_semantics=("parallel",),
            vmem_limit_bytes=VMEM_LIMIT_BYTES,
        ),
        cost_estimate=cost,
    )(*comps, *means, *invs)
    return out


if __name__ == "__main__":
    key = jax.random.PRNGKey(0)

    # sim_shapes = {"x": (3,), "y": (5,), "z": (8,)}  -> n_features M = 16
    B = 20
    sim_widths = {"x": 3, "y": 5, "z": 8}
    M = sum(sim_widths.values())

    k_sim, k_mean, k_var = jax.random.split(key, 3)
    sim_keys = sorted(sim_widths.keys())
    sim = {}
    for i, name in enumerate(sim_keys):
        sim[name] = jax.random.normal(
            jax.random.fold_in(k_sim, i), (B, sim_widths[name]), dtype=jnp.float32
        )

    # Deterministic "running" statistics of the OnlineNormalizationLayer.
    running_mean = jax.random.normal(k_mean, (M,), dtype=jnp.float32)
    running_var = jnp.abs(jax.random.normal(k_var, (M,), dtype=jnp.float32)) + 0.5

    # At this scale TB = 16 -> grid of 2 tiles with a ragged (clipped) last
    # block, exercising the cdiv / partial-block path of the kernel.
    out = default_head(sim, running_mean, running_var, use_pallas=True)
    out = jax.block_until_ready(out)

    # Pure-JAX reference with the module's exact formula.
    f_ref = jnp.concatenate([sim[k] for k in sim_keys], axis=-1)
    ref = (f_ref - running_mean[None, :]) / jnp.sqrt(running_var[None, :] + EPS)
    assert out.shape == (B, M)
    assert jnp.allclose(out, ref, atol=1e-5, rtol=1e-5), float(
        jnp.max(jnp.abs(out - ref)))

    print("KERNEL_OK")
</pallas_src>

<mosaic_0001>
module attributes {stable_mosaic.version = 11 : i64} {
  func.func @_head_norm_kernel(%arg0: i32, %arg1: memref<16x3xf32, #tpu.memory_space<vmem>>, %arg2: memref<16x5xf32, #tpu.memory_space<vmem>>, %arg3: memref<16x8xf32, #tpu.memory_space<vmem>>, %arg4: memref<1x3xf32, #tpu.memory_space<vmem>>, %arg5: memref<1x5xf32, #tpu.memory_space<vmem>>, %arg6: memref<1x8xf32, #tpu.memory_space<vmem>>, %arg7: memref<1x3xf32, #tpu.memory_space<vmem>>, %arg8: memref<1x5xf32, #tpu.memory_space<vmem>>, %arg9: memref<1x8xf32, #tpu.memory_space<vmem>>, %arg10: memref<16x16xf32, #tpu.memory_space<vmem>>) attributes {dimension_semantics = [#tpu.dimension_semantics<parallel>], iteration_bounds = array<i64: 2>, scalar_prefetch = 0 : i64, scratch_operands = 0 : i64, tpu.core_type = #tpu.core_type<tc>, window_params = [{transform_indices = @transform_0, window_bounds = array<i64: 16, 3>}, {transform_indices = @transform_1, window_bounds = array<i64: 16, 5>}, {transform_indices = @transform_2, window_bounds = array<i64: 16, 8>}, {pipeline_mode = #tpu.pipeline_mode<synchronous>, transform_indices = @transform_3, window_bounds = array<i64: 1, 3>}, {pipeline_mode = #tpu.pipeline_mode<synchronous>, transform_indices = @transform_4, window_bounds = array<i64: 1, 5>}, {pipeline_mode = #tpu.pipeline_mode<synchronous>, transform_indices = @transform_5, window_bounds = array<i64: 1, 8>}, {pipeline_mode = #tpu.pipeline_mode<synchronous>, transform_indices = @transform_6, window_bounds = array<i64: 1, 3>}, {pipeline_mode = #tpu.pipeline_mode<synchronous>, transform_indices = @transform_7, window_bounds = array<i64: 1, 5>}, {pipeline_mode = #tpu.pipeline_mode<synchronous>, transform_indices = @transform_8, window_bounds = array<i64: 1, 8>}, {transform_indices = @transform_9, window_bounds = array<i64: 16, 16>}]} {
    %c0 = arith.constant 0 : index
    %c0_0 = arith.constant 0 : index
    %0 = vector.load %arg1[%c0, %c0_0] : memref<16x3xf32, #tpu.memory_space<vmem>>, vector<16x3xf32>
    %c0_1 = arith.constant 0 : index
    %c0_2 = arith.constant 0 : index
    %1 = vector.load %arg4[%c0_1, %c0_2] : memref<1x3xf32, #tpu.memory_space<vmem>>, vector<1x3xf32>
    %2 = vector.broadcast %1 : vector<1x3xf32> to vector<16x3xf32>
    %3 = arith.subf %0, %2 : vector<16x3xf32>
    %c0_3 = arith.constant 0 : index
    %c0_4 = arith.constant 0 : index
    %4 = vector.load %arg7[%c0_3, %c0_4] : memref<1x3xf32, #tpu.memory_space<vmem>>, vector<1x3xf32>
    %5 = vector.broadcast %4 : vector<1x3xf32> to vector<16x3xf32>
    %6 = arith.mulf %3, %5 : vector<16x3xf32>
    %c0_5 = arith.constant 0 : index
    %c0_6 = arith.constant 0 : index
    %7 = vector.load %arg10[%c0_5, %c0_6] : memref<16x16xf32, #tpu.memory_space<vmem>>, vector<16x3xf32>
    tpu.vector_store %arg10[%c0_5, %c0_6], %6 {strides = array<i32>} : memref<16x16xf32, #tpu.memory_space<vmem>>, vector<16x3xf32>,
    %c0_7 = arith.constant 0 : index
    %c0_8 = arith.constant 0 : index
    %8 = vector.load %arg2[%c0_7, %c0_8] : memref<16x5xf32, #tpu.memory_space<vmem>>, vector<16x5xf32>
    %c0_9 = arith.constant 0 : index
    %c0_10 = arith.constant 0 : index
    %9 = vector.load %arg5[%c0_9, %c0_10] : memref<1x5xf32, #tpu.memory_space<vmem>>, vector<1x5xf32>
    %10 = vector.broadcast %9 : vector<1x5xf32> to vector<16x5xf32>
    %11 = arith.subf %8, %10 : vector<16x5xf32>
    %c0_11 = arith.constant 0 : index
    %c0_12 = arith.constant 0 : index
    %12 = vector.load %arg8[%c0_11, %c0_12] : memref<1x5xf32, #tpu.memory_space<vmem>>, vector<1x5xf32>
    %13 = vector.broadcast %12 : vector<1x5xf32> to vector<16x5xf32>
    %14 = arith.mulf %11, %13 : vector<16x5xf32>
    %c0_13 = arith.constant 0 : index
    %c3 = arith.constant 3 : index
    %15 = vector.load %arg10[%c0_13, %c3] : memref<16x16xf32, #tpu.memory_space<vmem>>, vector<16x5xf32>
    tpu.vector_store %arg10[%c0_13, %c3], %14 {strides = array<i32>} : memref<16x16xf32, #tpu.memory_space<vmem>>, vector<16x5xf32>,
    %c0_14 = arith.constant 0 : index
    %c0_15 = arith.constant 0 : index
    %16 = vector.load %arg3[%c0_14, %c0_15] : memref<16x8xf32, #tpu.memory_space<vmem>>, vector<16x8xf32>
    %c0_16 = arith.constant 0 : index
    %c0_17 = arith.constant 0 : index
    %17 = vector.load %arg6[%c0_16, %c0_17] : memref<1x8xf32, #tpu.memory_space<vmem>>, vector<1x8xf32>
    %18 = vector.broadcast %17 : vector<1x8xf32> to vector<16x8xf32>
    %19 = arith.subf %16, %18 : vector<16x8xf32>
    %c0_18 = arith.constant 0 : index
    %c0_19 = arith.constant 0 : index
    %20 = vector.load %arg9[%c0_18, %c0_19] : memref<1x8xf32, #tpu.memory_space<vmem>>, vector<1x8xf32>
    %21 = vector.broadcast %20 : vector<1x8xf32> to vector<16x8xf32>
    %22 = arith.mulf %19, %21 : vector<16x8xf32>
    %c0_20 = arith.constant 0 : index
    %c8 = arith.constant 8 : index
    %23 = vector.load %arg10[%c0_20, %c8] : memref<16x16xf32, #tpu.memory_space<vmem>>, vector<16x8xf32>
    tpu.vector_store %arg10[%c0_20, %c8], %22 {strides = array<i32>} : memref<16x16xf32, #tpu.memory_space<vmem>>, vector<16x8xf32>,
    return
  }
  func.func @transform_0(%arg0: i32) -> (i32, i32) {
    %c0_i32 = arith.constant 0 : i32
    %c0_i32_0 = arith.constant 0 : i32
    return %arg0, %c0_i32 : i32, i32
  }
  func.func @transform_1(%arg0: i32) -> (i32, i32) {
    %c0_i32 = arith.constant 0 : i32
    %c0_i32_0 = arith.constant 0 : i32
    return %arg0, %c0_i32 : i32, i32
  }
  func.func @transform_2(%arg0: i32) -> (i32, i32) {
    %c0_i32 = arith.constant 0 : i32
    %c0_i32_0 = arith.constant 0 : i32
    return %arg0, %c0_i32 : i32, i32
  }
  func.func @transform_3(%arg0: i32) -> (i32, i32) {
    %c0_i32 = arith.constant 0 : i32
    %c0_i32_0 = arith.constant 0 : i32
    %c0_i32_1 = arith.constant 0 : i32
    return %c0_i32, %c0_i32_0 : i32, i32
  }
  func.func @transform_4(%arg0: i32) -> (i32, i32) {
    %c0_i32 = arith.constant 0 : i32
    %c0_i32_0 = arith.constant 0 : i32
    %c0_i32_1 = arith.constant 0 : i32
    return %c0_i32, %c0_i32_0 : i32, i32
  }
  func.func @transform_5(%arg0: i32) -> (i32, i32) {
    %c0_i32 = arith.constant 0 : i32
    %c0_i32_0 = arith.constant 0 : i32
    %c0_i32_1 = arith.constant 0 : i32
    return %c0_i32, %c0_i32_0 : i32, i32
  }
  func.func @transform_6(%arg0: i32) -> (i32, i32) {
    %c0_i32 = arith.constant 0 : i32
    %c0_i32_0 = arith.constant 0 : i32
    %c0_i32_1 = arith.constant 0 : i32
    return %c0_i32, %c0_i32_0 : i32, i32
  }
  func.func @transform_7(%arg0: i32) -> (i32, i32) {
    %c0_i32 = arith.constant 0 : i32
    %c0_i32_0 = arith.constant 0 : i32
    %c0_i32_1 = arith.constant 0 : i32
    return %c0_i32, %c0_i32_0 : i32, i32
  }
  func.func @transform_8(%arg0: i32) -> (i32, i32) {
    %c0_i32 = arith.constant 0 : i32
    %c0_i32_0 = arith.constant 0 : i32
    %c0_i32_1 = arith.constant 0 : i32
    return %c0_i32, %c0_i32_0 : i32, i32
  }
  func.func @transform_9(%arg0: i32) -> (i32, i32) {
    %c0_i32 = arith.constant 0 : i32
    %c0_i32_0 = arith.constant 0 : i32
    return %arg0, %c0_i32 : i32, i32
  }
}

</mosaic_0001>

<llo_original>
// kernel: tpu_custom_call.1
$region0: #{tpu_custom_call.1}
  #allocation0 [shape = 'u32[]', space=smem, size = 0x4, offset = 0x4, fixed_abs, tag = 'smem constant byte address 0x4 - core index']
  #allocation1 [shape = 'u32[144,128]{1,0:T(1,128)}', space=vmem, size = 0x12000, scoped, tag = 'internal scratch']
  %s0 = inlined_call_operand.vmem [shape: f32[20,3], index: 0, kind: input, shape index: {}]
  %s1 = inlined_call_operand.vmem [shape: f32[20,5], index: 1, kind: input, shape index: {}]
  %s2 = inlined_call_operand.vmem [shape: f32[20,8], index: 2, kind: input, shape index: {}]
  %s3 = inlined_call_operand.vmem [shape: f32[1,3], index: 3, kind: input, shape index: {}]
  %s4 = inlined_call_operand.vmem [shape: f32[1,5], index: 4, kind: input, shape index: {}]
  %s5 = inlined_call_operand.vmem [shape: f32[1,8], index: 5, kind: input, shape index: {}]
  %s6 = inlined_call_operand.vmem [shape: f32[1,3], index: 6, kind: input, shape index: {}]
  %s7 = inlined_call_operand.vmem [shape: f32[1,5], index: 7, kind: input, shape index: {}]
  %s8 = inlined_call_operand.vmem [shape: f32[1,8], index: 8, kind: input, shape index: {}]
  %s9 = inlined_call_operand.vmem [shape: f32[20,16], index: 9, kind: output, shape index: {}]
  %s10 = sld [smem:[#allocation0]]
  $region117: #{tpu_custom_call.1} parent=0
    _
  %s12 = ssub.s32 1, %s10
  %s13 = scalar_select 0, %s12, %s10
  $region1: #{tpu_custom_call.1} parent=0
    #allocation2 [shape = 'u8[16384]{0}', space=vmem, size = 0x4000, scoped, tag = 'output window, operand 0']
    loop: start=0, step=1, limit=4
    $region2: #{tpu_custom_call.1} parent=1 // loop_pre_header
      _
    $region3: #{tpu_custom_call.1} parent=1 // loop_header
      %s15 = sphi 0, %s19
      %p16 = scmp.ge.s32.totalorder %s15, 4
      %s25 = sphi 0, %s27
      %s28 = sphi 0, %s25
      %s29 = sphi 0, %s28
      %s45 = sphi 0, %s29
      %s51 = sphi 0, %s53
      %s54 = sphi 0, %s51
      %s55 = sphi 0, %s54
      %s71 = sphi 0, %s55
      %s77 = sphi 0, %s79
      %s80 = sphi 0, %s77
      %s81 = sphi 0, %s80
      %s97 = sphi 0, %s81
      %s101 = sphi 0, %s101
      %s103 = sphi 0, %s101
      %s104 = sphi 0, %s103
      %s118 = sphi 0, %s104
      %s122 = sphi 0, %s122
      %s124 = sphi 0, %s122
      %s125 = sphi 0, %s124
      %s139 = sphi 0, %s125
      %s143 = sphi 0, %s143
      %s145 = sphi 0, %s143
      %s146 = sphi 0, %s145
      %s160 = sphi 0, %s146
      %s164 = sphi 0, %s164
      %s166 = sphi 0, %s164
      %s167 = sphi 0, %s166
      %s181 = sphi 0, %s167
      %s185 = sphi 0, %s185
      %s187 = sphi 0, %s185
      %s188 = sphi 0, %s187
      %s202 = sphi 0, %s188
      %s206 = sphi 0, %s206
      %s208 = sphi 0, %s206
      %s209 = sphi 0, %s208
      %s223 = sphi 0, %s209
      %s229 = sphi 0, %s231
      %s232 = sphi 0, %s229
      %s233 = sphi 0, %s232
      %s249 = sphi 0, %s233
    $region4: #{tpu_custom_call.1} parent=1 // loop_header_branch
      %18 = sbr.rel (%p16) target = $region8
    $region5: #{tpu_custom_call.1} parent=1 // loop_body
      %s20 = ssub.s32 %s15, 1
      %s21 = ssub.s32 %s15, 2
      %s22 = sadd.s32 %s15, 1
      %s23 = ssub.s32 %s15, %s22
      %p24 = scmp.eq.s32.totalorder %s23, 0
      %s26 = sadd.s32 %s25, 1
      %s27 = scalar_select %p24, %s25, %s26
      %p30 = pneg %p24
      %p31 = scmp.eq.s32.totalorder %s15, 1
      %p32 = por %p30, %p31
      %p33 = scmp.ne.s32.totalorder %s25, %s28
      %p34 = scmp.eq.s32.totalorder %s15, 0
      %p35 = por %p33, %p34
      %p36 = scmp.ne.s32.totalorder %s25, %s28
      %p37 = scmp.eq.s32.totalorder %s20, 1
      %p38 = por %p36, %p37
      %p39 = scmp.ne.s32.totalorder %s28, %s29
      %p40 = scmp.eq.s32.totalorder %s20, 0
      %p41 = por %p39, %p40
      %p42 = scmp.ne.s32.totalorder %s28, %s29
      %p43 = scmp.eq.s32.totalorder %s21, 1
      %p44 = por %p42, %p43
      %p46 = scmp.ne.s32.totalorder %s29, %s45
      %p47 = scmp.eq.s32.totalorder %s21, 0
      %p48 = por %p46, %p47
      %s49 = ssub.s32 %s15, %s22
      %p50 = scmp.eq.s32.totalorder %s49, 0
      %s52 = sadd.s32 %s51, 1
      %s53 = scalar_select %p50, %s51, %s52
      %p56 = pneg %p50
      %p57 = scmp.eq.s32.totalorder %s15, 1
      %p58 = por %p56, %p57
      %p59 = scmp.ne.s32.totalorder %s51, %s54
      %p60 = scmp.eq.s32.totalorder %s15, 0
      %p61 = por %p59, %p60
      %p62 = scmp.ne.s32.totalorder %s51, %s54
      %p63 = scmp.eq.s32.totalorder %s20, 1
      %p64 = por %p62, %p63
      %p65 = scmp.ne.s32.totalorder %s54, %s55
      %p66 = scmp.eq.s32.totalorder %s20, 0
      %p67 = por %p65, %p66
      %p68 = scmp.ne.s32.totalorder %s54, %s55
      %p69 = scmp.eq.s32.totalorder %s21, 1
      %p70 = por %p68, %p69
      %p72 = scmp.ne.s32.totalorder %s55, %s71
      %p73 = scmp.eq.s32.totalorder %s21, 0
      %p74 = por %p72, %p73
      %s75 = ssub.s32 %s15, %s22
      %p76 = scmp.eq.s32.totalorder %s75, 0
      %s78 = sadd.s32 %s77, 1
      %s79 = scalar_select %p76, %s77, %s78
      %p82 = pneg %p76
      %p83 = scmp.eq.s32.totalorder %s15, 1
      %p84 = por %p82, %p83
      %p85 = scmp.ne.s32.totalorder %s77, %s80
      %p86 = scmp.eq.s32.totalorder %s15, 0
      %p87 = por %p85, %p86
      %p88 = scmp.ne.s32.totalorder %s77, %s80
      %p89 = scmp.eq.s32.totalorder %s20, 1
      %p90 = por %p88, %p89
      %p91 = scmp.ne.s32.totalorder %s80, %s81
      %p92 = scmp.eq.s32.totalorder %s20, 0
      %p93 = por %p91, %p92
      %p94 = scmp.ne.s32.totalorder %s80, %s81
      %p95 = scmp.eq.s32.totalorder %s21, 1
      %p96 = por %p94, %p95
      %p98 = scmp.ne.s32.totalorder %s81, %s97
      %p99 = scmp.eq.s32.totalorder %s21, 0
      %p100 = por %p98, %p99
      %s102 = sadd.s32 %s101, 1
      %p105 = scmp.eq.s32.totalorder %s15, 1
      %p106 = scmp.ne.s32.totalorder %s101, %s103
      %p107 = scmp.eq.s32.totalorder %s15, 0
      %p108 = por %p106, %p107
      %p109 = scmp.ne.s32.totalorder %s101, %s103
      %p110 = scmp.eq.s32.totalorder %s20, 1
      %p111 = por %p109, %p110
      %p112 = scmp.ne.s32.totalorder %s103, %s104
      %p113 = scmp.eq.s32.totalorder %s20, 0
      %p114 = por %p112, %p113
      %p115 = scmp.ne.s32.totalorder %s103, %s104
      %p116 = scmp.eq.s32.totalorder %s21, 1
      %p117 = por %p115, %p116
      %p119 = scmp.ne.s32.totalorder %s104, %s118
      %p120 = scmp.eq.s32.totalorder %s21, 0
      %p121 = por %p119, %p120
      %s123 = sadd.s32 %s122, 1
      %p126 = scmp.eq.s32.totalorder %s15, 1
      %p127 = scmp.ne.s32.totalorder %s122, %s124
      %p128 = scmp.eq.s32.totalorder %s15, 0
      %p129 = por %p127, %p128
      %p130 = scmp.ne.s32.totalorder %s122, %s124
      %p131 = scmp.eq.s32.totalorder %s20, 1
      %p132 = por %p130, %p131
      %p133 = scmp.ne.s32.totalorder %s124, %s125
      %p134 = scmp.eq.s32.totalorder %s20, 0
      %p135 = por %p133, %p134
      %p136 = scmp.ne.s32.totalorder %s124, %s125
      %p137 = scmp.eq.s32.totalorder %s21, 1
      %p138 = por %p136, %p137
      %p140 = scmp.ne.s32.totalorder %s125, %s139
      %p141 = scmp.eq.s32.totalorder %s21, 0
      %p142 = por %p140, %p141
      %s144 = sadd.s32 %s143, 1
      %p147 = scmp.eq.s32.totalorder %s15, 1
      %p148 = scmp.ne.s32.totalorder %s143, %s145
      %p149 = scmp.eq.s32.totalorder %s15, 0
      %p150 = por %p148, %p149
      %p151 = scmp.ne.s32.totalorder %s143, %s145
      %p152 = scmp.eq.s32.totalorder %s20, 1
      %p153 = por %p151, %p152
      %p154 = scmp.ne.s32.totalorder %s145, %s146
      %p155 = scmp.eq.s32.totalorder %s20, 0
      %p156 = por %p154, %p155
      %p157 = scmp.ne.s32.totalorder %s145, %s146
      %p158 = scmp.eq.s32.totalorder %s21, 1
      %p159 = por %p157, %p158
      %p161 = scmp.ne.s32.totalorder %s146, %s160
      %p162 = scmp.eq.s32.totalorder %s21, 0
      %p163 = por %p161, %p162
      %s165 = sadd.s32 %s164, 1
      %p168 = scmp.eq.s32.totalorder %s15, 1
      %p169 = scmp.ne.s32.totalorder %s164, %s166
      %p170 = scmp.eq.s32.totalorder %s15, 0
      %p171 = por %p169, %p170
      %p172 = scmp.ne.s32.totalorder %s164, %s166
      %p173 = scmp.eq.s32.totalorder %s20, 1
      %p174 = por %p172, %p173
      %p175 = scmp.ne.s32.totalorder %s166, %s167
      %p176 = scmp.eq.s32.totalorder %s20, 0
      %p177 = por %p175, %p176
      %p178 = scmp.ne.s32.totalorder %s166, %s167
      %p179 = scmp.eq.s32.totalorder %s21, 1
      %p180 = por %p178, %p179
      %p182 = scmp.ne.s32.totalorder %s167, %s181
      %p183 = scmp.eq.s32.totalorder %s21, 0
      %p184 = por %p182, %p183
      %s186 = sadd.s32 %s185, 1
      %p189 = scmp.eq.s32.totalorder %s15, 1
      %p190 = scmp.ne.s32.totalorder %s185, %s187
      %p191 = scmp.eq.s32.totalorder %s15, 0
      %p192 = por %p190, %p191
      %p193 = scmp.ne.s32.totalorder %s185, %s187
      %p194 = scmp.eq.s32.totalorder %s20, 1
      %p195 = por %p193, %p194
      %p196 = scmp.ne.s32.totalorder %s187, %s188
      %p197 = scmp.eq.s32.totalorder %s20, 0
      %p198 = por %p196, %p197
      %p199 = scmp.ne.s32.totalorder %s187, %s188
      %p200 = scmp.eq.s32.totalorder %s21, 1
      %p201 = por %p199, %p200
      %p203 = scmp.ne.s32.totalorder %s188, %s202
      %p204 = scmp.eq.s32.totalorder %s21, 0
      %p205 = por %p203, %p204
      %s207 = sadd.s32 %s206, 1
      %p210 = scmp.eq.s32.totalorder %s15, 1
      %p211 = scmp.ne.s32.totalorder %s206, %s208
      %p212 = scmp.eq.s32.totalorder %s15, 0
      %p213 = por %p211, %p212
      %p214 = scmp.ne.s32.totalorder %s206, %s208
      %p215 = scmp.eq.s32.totalorder %s20, 1
      %p216 = por %p214, %p215
      %p217 = scmp.ne.s32.totalorder %s208, %s209
      %p218 = scmp.eq.s32.totalorder %s20, 0
      %p219 = por %p217, %p218
      %p220 = scmp.ne.s32.totalorder %s208, %s209
      %p221 = scmp.eq.s32.totalorder %s21, 1
      %p222 = por %p220, %p221
      %p224 = scmp.ne.s32.totalorder %s209, %s223
      %p225 = scmp.eq.s32.totalorder %s21, 0
      %p226 = por %p224, %p225
      %s227 = ssub.s32 %s15, %s22
      %p228 = scmp.eq.s32.totalorder %s227, 0
      %s230 = sadd.s32 %s229, 1
      %s231 = scalar_select %p228, %s229, %s230
      %p234 = pneg %p228
      %p235 = scmp.eq.s32.totalorder %s15, 1
      %p236 = por %p234, %p235
      %p237 = scmp.ne.s32.totalorder %s229, %s232
      %p238 = scmp.eq.s32.totalorder %s15, 0
      %p239 = por %p237, %p238
      %p240 = scmp.ne.s32.totalorder %s229, %s232
      %p241 = scmp.eq.s32.totalorder %s20, 1
      %p242 = por %p240, %p241
      %p243 = scmp.ne.s32.totalorder %s232, %s233
      %p244 = scmp.eq.s32.totalorder %s20, 0
      %p245 = por %p243, %p244
      %p246 = scmp.ne.s32.totalorder %s232, %s233
      %p247 = scmp.eq.s32.totalorder %s21, 1
      %p248 = por %p246, %p247
      %p250 = scmp.ne.s32.totalorder %s233, %s249
      %p251 = scmp.eq.s32.totalorder %s21, 0
      %p252 = por %p250, %p251
      %p253 = scmp.le.s32.totalorder 1, %s15
      %p254 = scmp.lt.s32.totalorder %s15, 3
      %p255 = pnand %p253, %p254
      %p256 = pneg %p255
      // Predicated region
      $region9: #{tpu_custom_call.1} parent=5 // pred_check
        _
      $region10: #{tpu_custom_call.1} parent=5 // pred_check_branch
        %258 = sbr.rel (%p255) target = $region12
      $region11: #{tpu_custom_call.1} parent=5 // pred_region
        %s259 = ssub.s32 %s15, 1
        // Predicated region
        $region13: #{tpu_custom_call.1} parent=11 // pred_check
          %p260 = pneg %p114
        $region14: #{tpu_custom_call.1} parent=11 // pred_check_branch
          %262 = sbr.rel (%p260) target = $region16
        $region15: #{tpu_custom_call.1} parent=11 // pred_region
          _
        $region16: #{tpu_custom_call.1} parent=11 // pred_fallthru
          _
        // Predicated region
        $region17: #{tpu_custom_call.1} parent=11 // pred_check
          %p263 = pneg %p135
        $region18: #{tpu_custom_call.1} parent=11 // pred_check_branch
          %265 = sbr.rel (%p263) target = $region20
        $region19: #{tpu_custom_call.1} parent=11 // pred_region
          _
        $region20: #{tpu_custom_call.1} parent=11 // pred_fallthru
          _
        // Predicated region
        $region21: #{tpu_custom_call.1} parent=11 // pred_check
          %p266 = pneg %p156
        $region22: #{tpu_custom_call.1} parent=11 // pred_check_branch
          %268 = sbr.rel (%p266) target = $region24
        $region23: #{tpu_custom_call.1} parent=11 // pred_region
          _
        $region24: #{tpu_custom_call.1} parent=11 // pred_fallthru
          _
        // Predicated region
        $region25: #{tpu_custom_call.1} parent=11 // pred_check
          %p269 = pneg %p177
        $region26: #{tpu_custom_call.1} parent=11 // pred_check_branch
          %271 = sbr.rel (%p269) target = $region28
        $region27: #{tpu_custom_call.1} parent=11 // pred_region
          _
        $region28: #{tpu_custom_call.1} parent=11 // pred_fallthru
          _
        // Predicated region
        $region29: #{tpu_custom_call.1} parent=11 // pred_check
          %p272 = pneg %p198
        $region30: #{tpu_custom_call.1} parent=11 // pred_check_branch
          %274 = sbr.rel (%p272) target = $region32
        $region31: #{tpu_custom_call.1} parent=11 // pred_region
          _
        $region32: #{tpu_custom_call.1} parent=11 // pred_fallthru
          _
        // Predicated region
        $region33: #{tpu_custom_call.1} parent=11 // pred_check
          %p275 = pneg %p219
        $region34: #{tpu_custom_call.1} parent=11 // pred_check_branch
          %277 = sbr.rel (%p275) target = $region36
        $region35: #{tpu_custom_call.1} parent=11 // pred_region
          _
        $region36: #{tpu_custom_call.1} parent=11 // pred_fallthru
          _
      $region12: #{tpu_custom_call.1} parent=5 // pred_fallthru
        _
      %p278 = scmp.lt.s32.totalorder %s15, 2
      // Predicated region
      $region37: #{tpu_custom_call.1} parent=5 // pred_check
        %p279 = pneg %p278
      $region38: #{tpu_custom_call.1} parent=5 // pred_check_branch
        %281 = sbr.rel (%p279) target = $region40
      $region39: #{tpu_custom_call.1} parent=5 // pred_region
        // Predicated region
        $region41: #{tpu_custom_call.1} parent=39 // pred_check
          %p282 = pneg %p35
        $region42: #{tpu_custom_call.1} parent=39 // pred_check_branch
          %284 = sbr.rel (%p282) target = $region44
        $region43: #{tpu_custom_call.1} parent=39 // pred_region
          %s285 = smul.u32 2, %s15
          %s286 = ssub.s32 3, %s285
          %p287 = scmp.lt.s32.totalorder %s286, 2
          %s288 = scalar_select %p287, %s286, 2
          %s289 = smul.u32 128, %s288
          %p290 = scmp.lt.s32.totalorder %s285, 2
          %s291 = scalar_select %p290, %s285, 2
          %s292 = smul.addr %s291, 8
          %s293 = scalar_lea.vmem %s0, %s292
          %s294 = smul.u32 2, %s15
          %s295 = ssub.s32 3, %s294
          %p296 = scmp.lt.s32.totalorder %s295, 2
          %s297 = scalar_select %p296, %s295, 2
          %s298 = smul.u32 128, %s297
        $region44: #{tpu_custom_call.1} parent=39 // pred_fallthru
          _
        // Predicated region
        $region45: #{tpu_custom_call.1} parent=39 // pred_check
          %p299 = pneg %p61
        $region46: #{tpu_custom_call.1} parent=39 // pred_check_branch
          %301 = sbr.rel (%p299) target = $region48
        $region47: #{tpu_custom_call.1} parent=39 // pred_region
          %s302 = smul.u32 2, %s15
          %s303 = ssub.s32 3, %s302
          %p304 = scmp.lt.s32.totalorder %s303, 2
          %s305 = scalar_select %p304, %s303, 2
          %s306 = smul.u32 128, %s305
          %p307 = scmp.lt.s32.totalorder %s302, 2
          %s308 = scalar_select %p307, %s302, 2
          %s309 = smul.addr %s308, 8
          %s310 = scalar_lea.vmem %s1, %s309
          %s311 = smul.u32 2, %s15
          %s312 = ssub.s32 3, %s311
          %p313 = scmp.lt.s32.totalorder %s312, 2
          %s314 = scalar_select %p313, %s312, 2
          %s315 = smul.u32 128, %s314
        $region48: #{tpu_custom_call.1} parent=39 // pred_fallthru
          _
        // Predicated region
        $region49: #{tpu_custom_call.1} parent=39 // pred_check
          %p316 = pneg %p87
        $region50: #{tpu_custom_call.1} parent=39 // pred_check_branch
          %318 = sbr.rel (%p316) target = $region52
        $region51: #{tpu_custom_call.1} parent=39 // pred_region
          %s319 = smul.u32 2, %s15
          %s320 = ssub.s32 3, %s319
          %p321 = scmp.lt.s32.totalorder %s320, 2
          %s322 = scalar_select %p321, %s320, 2
          %s323 = smul.u32 128, %s322
          %p324 = scmp.lt.s32.totalorder %s319, 2
          %s325 = scalar_select %p324, %s319, 2
          %s326 = smul.addr %s325, 8
          %s327 = scalar_lea.vmem %s2, %s326
          %s328 = smul.u32 2, %s15
          %s329 = ssub.s32 3, %s328
          %p330 = scmp.lt.s32.totalorder %s329, 2
          %s331 = scalar_select %p330, %s329, 2
          %s332 = smul.u32 128, %s331
        $region52: #{tpu_custom_call.1} parent=39 // pred_fallthru
          _
      $region40: #{tpu_custom_call.1} parent=5 // pred_fallthru
        _
      %p333 = scmp.le.s32.totalorder 1, %s15
      %p334 = scmp.lt.s32.totalorder %s15, 3
      %p335 = pnand %p333, %p334
      %p336 = pneg %p335
      // Predicated region
      $region53: #{tpu_custom_call.1} parent=5 // pred_check
        _
      $region54: #{tpu_custom_call.1} parent=5 // pred_check_branch
        %338 = sbr.rel (%p335) target = $region56
      $region55: #{tpu_custom_call.1} parent=5 // pred_region
        %s339 = ssub.s32 %s15, 1
        %s340 = smul.u32 2, %s20
        %s341 = ssub.s32 3, %s340
        %p342 = scmp.lt.s32.totalorder %s341, 2
        %s343 = scalar_select %p342, %s341, 2
        %s344 = smul.u32 128, %s343
        %p345 = scmp.lt.s32.totalorder %s340, 2
        %s346 = scalar_select %p345, %s340, 2
        %s347 = smul.addr %s346, 8
        %s348 = scalar_lea.vmem %s0, %s347
        %p349 = pneg %p41
        %p350 = pneg %p38
        %s351 = smul.u32 2, %s20
        %s352 = ssub.s32 3, %s351
        %p353 = scmp.lt.s32.totalorder %s352, 2
        %s354 = scalar_select %p353, %s352, 2
        %s355 = smul.u32 128, %s354
        %p356 = scmp.lt.s32.totalorder %s351, 2
        %s357 = scalar_select %p356, %s351, 2
        %s358 = smul.addr %s357, 8
        %s359 = scalar_lea.vmem %s1, %s358
        %p360 = pneg %p67
        %p361 = pneg %p64
        %s362 = smul.u32 2, %s20
        %s363 = ssub.s32 3, %s362
        %p364 = scmp.lt.s32.totalorder %s363, 2
        %s365 = scalar_select %p364, %s363, 2
        %s366 = smul.u32 128, %s365
        %p367 = scmp.lt.s32.totalorder %s362, 2
        %s368 = scalar_select %p367, %s362, 2
        %s369 = smul.addr %s368, 8
        %s370 = scalar_lea.vmem %s2, %s369
        %p371 = pneg %p93
        %p372 = pneg %p90
        %p373 = pneg %p114
        %p374 = pneg %p111
        %p375 = pneg %p135
        %p376 = pneg %p132
        %p377 = pneg %p156
        %p378 = pneg %p153
        %p379 = pneg %p177
        %p380 = pneg %p174
        %p381 = pneg %p198
        %p382 = pneg %p195
        %p383 = pneg %p219
        %p384 = pneg %p216
        %p385 = pneg %p245
        %p386 = pneg %p242
        %s387 = sand.u32 %s232, 1
        %s388 = sand.u32 %s232, 1
        %s389 = smul.addr %s388, 16
        %s390 = scalar_lea.vmem [#allocation2], %s389
        %s391 = smul.u32 2, %s20
        %s392 = ssub.s32 3, %s391
        %p393 = scmp.lt.s32.totalorder %s392, 2
        %s394 = scalar_select %p393, %s392, 2
        %s395 = smul.u32 128, %s394
        %p396 = scmp.lt.s32.totalorder %s391, 2
        %s397 = scalar_select %p396, %s391, 2
        %s398 = smul.addr %s397, 8
        %s399 = scalar_lea.vmem %s0, %s398
        %s400 = smul.u32 2, %s20
        %s401 = ssub.s32 3, %s400
        %p402 = scmp.lt.s32.totalorder %s401, 2
        %s403 = scalar_select %p402, %s401, 2
        %s404 = smul.u32 128, %s403
        %s405 = smul.u32 2, %s20
        %s406 = ssub.s32 3, %s405
        %p407 = scmp.lt.s32.totalorder %s406, 2
        %s408 = scalar_select %p407, %s406, 2
        %s409 = smul.u32 128, %s408
        %p410 = scmp.lt.s32.totalorder %s405, 2
        %s411 = scalar_select %p410, %s405, 2
        %s412 = smul.addr %s411, 8
        %s413 = scalar_lea.vmem %s1, %s412
        %s414 = smul.u32 2, %s20
        %s415 = ssub.s32 3, %s414
        %p416 = scmp.lt.s32.totalorder %s415, 2
        %s417 = scalar_select %p416, %s415, 2
        %s418 = smul.u32 128, %s417
        %s419 = smul.u32 2, %s20
        %s420 = ssub.s32 3, %s419
        %p421 = scmp.lt.s32.totalorder %s420, 2
        %s422 = scalar_select %p421, %s420, 2
        %s423 = smul.u32 128, %s422
        %p424 = scmp.lt.s32.totalorder %s419, 2
        %s425 = scalar_select %p424, %s419, 2
        %s426 = smul.addr %s425, 8
        %s427 = scalar_lea.vmem %s2, %s426
        %s428 = smul.u32 2, %s20
        %s429 = ssub.s32 3, %s428
        %p430 = scmp.lt.s32.totalorder %s429, 2
        %s431 = scalar_select %p430, %s429, 2
        %s432 = smul.u32 128, %s431
        %s433 = smul.u32 2, %s20
        %s434 = ssub.s32 3, %s433
        %p435 = scmp.lt.s32.totalorder %s434, 2
        %s436 = scalar_select %p435, %s434, 2
        %s437 = smul.u32 128, %s436
        %v438 = vld [vmem:[%s399] sm:$0xff]
        %v439 = vld [vmem:[%s399 + $0x8] sm:$0xff]
        %v440 = vld [vmem:[%s3] sm:$0x1]
        %v442 = vlaneseq
        %v443 = vshrl.u32 %v442, 7
        %v444 = vsub.s32 0, %v443
        %v445 = vrot.slane %v440, %v444
        %v447 = vsub.f32 %v438, %v445
        %v448 = vsub.f32 %v439, %v445
        %v449 = vld [vmem:[%s6] sm:$0x1]
        %v451 = vlaneseq
        %v452 = vshrl.u32 %v451, 7
        %v453 = vsub.s32 0, %v452
        %v454 = vrot.slane %v449, %v453
        %v456 = vmul.f32 %v447, %v454
        %v457 = vmul.f32 %v448, %v454
        %vm458 = vcmask 23552
        %459 = vst.msk [vmem:[%s390] sm:$0xff] %vm458, %v456
        %460 = vst.msk [vmem:[%s390 + $0x8] sm:$0xff] %vm458, %v457
        %v461 = vld [vmem:[%s413] sm:$0xff]
        %v462 = vld [vmem:[%s413 + $0x8] sm:$0xff]
        %v463 = vld [vmem:[%s4] sm:$0x1]
        %v465 = vlaneseq
        %v466 = vshrl.u32 %v465, 7
        %v467 = vsub.s32 0, %v466
        %v468 = vrot.slane %v463, %v467
        %v470 = vsub.f32 %v461, %v468
        %v471 = vsub.f32 %v462, %v468
        %v472 = vld [vmem:[%s7] sm:$0x1]
        %v474 = vlaneseq
        %v475 = vshrl.u32 %v474, 7
        %v476 = vsub.s32 0, %v475
        %v477 = vrot.slane %v472, %v476
        %v479 = vmul.f32 %v470, %v477
        %v480 = vmul.f32 %v471, %v477
        %483 = vrot.lane.b32.xlu0 %v479, 3
        %v484 = vpop.permute.xlu0 %483
        %485 = vrot.lane.b32.xlu0 %v480, 3
        %v486 = vpop.permute.xlu0 %485
        %vm489 = vcmask 64536
        %490 = vst.msk [vmem:[%s390] sm:$0xff] %vm489, %v484
        %491 = vst.msk [vmem:[%s390 + $0x8] sm:$0xff] %vm489, %v486
        %v492 = vld [vmem:[%s427] sm:$0xff]
        %v493 = vld [vmem:[%s427 + $0x8] sm:$0xff]
        %v494 = vld [vmem:[%s5] sm:$0x1]
        %v496 = vlaneseq
        %v497 = vshrl.u32 %v496, 7
        %v498 = vsub.s32 0, %v497
        %v499 = vrot.slane %v494, %v498
        %v501 = vsub.f32 %v492, %v499
        %v502 = vsub.f32 %v493, %v499
        %v503 = vld [vmem:[%s8] sm:$0x1]
        %v505 = vlaneseq
        %v506 = vshrl.u32 %v505, 7
        %v507 = vsub.s32 0, %v506
        %v508 = vrot.slane %v503, %v507
        %v510 = vmul.f32 %v501, %v508
        %v511 = vmul.f32 %v502, %v508
        %514 = vrot.lane.b32.xlu0 %v510, 8
        %v515 = vpop.permute.xlu0 %514
        %516 = vrot.lane.b32.xlu0 %v511, 8
        %v517 = vpop.permute.xlu0 %516
        %vm520 = vcmask 130112
        %521 = vst.msk [vmem:[%s390] sm:$0xff] %vm520, %v515
        %522 = vst.msk [vmem:[%s390 + $0x8] sm:$0xff] %vm520, %v517
        %s523 = sand.u32 %s232, 1
        %s524 = sand.u32 %s232, 1
        %s525 = smul.addr %s524, 16
        %s526 = scalar_lea.vmem [#allocation2], %s525
        // Predicated region
        $region57: #{tpu_custom_call.1} parent=55 // pred_check
          %p527 = pneg %p242
        $region58: #{tpu_custom_call.1} parent=55 // pred_check_branch
          %529 = sbr.rel (%p527) target = $region60
        $region59: #{tpu_custom_call.1} parent=55 // pred_region
          %s530 = smul.u32 2, %s20
          %s531 = ssub.s32 3, %s530
          %p532 = scmp.lt.s32.totalorder %s531, 2
          %s533 = scalar_select %p532, %s531, 2
          %s534 = smul.u32 128, %s533
          %p535 = scmp.ne.s32.totalorder 0, %s534
          %s536 = smul.addr %s530, 8
          %s537 = scalar_lea.vmem %s9, %s536
          // Predicated region
          $region61: #{tpu_custom_call.1} parent=59 // pred_check
            %p538 = pneg %p535
          $region62: #{tpu_custom_call.1} parent=59 // pred_check_branch
            %540 = sbr.rel (%p538) target = $region64
          $region63: #{tpu_custom_call.1} parent=59 // pred_region
            // Predicated region
            $region65: #{tpu_custom_call.1} parent=63 // pred_check
              _
            $region66: #{tpu_custom_call.1} parent=63 // pred_check_branch
              %542 = sbr.rel (0) target = $region68
            $region67: #{tpu_custom_call.1} parent=63 // pred_region
              // Predicated region
              $region87: #{tpu_custom_call.1} parent=67 // pred_check
                _
              $region88: #{tpu_custom_call.1} parent=67 // pred_check_branch
                %593 = sbr.rel (0) target = $region90
              $region89: #{tpu_custom_call.1} parent=67 // pred_region
                %s594 = sshrl.u32 %s533, 1
                // While loop
                $region91: #{tpu_custom_call.1} parent=89 // loop_pre_header
                  _
                $region92: #{tpu_custom_call.1} parent=89 // loop_header
                  %s596 = sphi 0, %s598
                  %p597 = scmp.ge.s32.totalorder %s596, %s594
                  %s601 = sphi 0, %s610
                  %s602 = sphi %s526, %s613
                  %s603 = sphi %s537, %s614
                $region93: #{tpu_custom_call.1} parent=89 // loop_header_branch
                  %600 = sbr.rel (%p597) target = $region97
                $region94: #{tpu_custom_call.1} parent=89 // loop_body
                  %v604 = vld [vmem:[%s602] sm:$0xff]
                  %605 = vst [vmem:[%s603] sm:$0xff] %v604
                  %v606 = vld [vmem:[%s602 + $0x8] sm:$0xff]
                  %607 = vst [vmem:[%s603 + $0x8] sm:$0xff] %v606
                  %s608 = sadd.s32 1, %s601
                  %p609 = scmp.ge.s32.totalorder %s608, %s594
                  %s610 = scalar_select %p609, 0, %s608
                  %s611 = smul.u32 %s610, 16
                  %s612 = smul.u32 %s610, 16
                  %s613 = scalar_lea.vmem %s526, %s611 [#allocation2]
                  %s614 = scalar_lea.vmem %s537, %s612
                $region95: #{tpu_custom_call.1} parent=89 // loop_footer
                  %s598 = sadd.s32 %s596, 1
                $region96: #{tpu_custom_call.1} parent=89 // loop_footer_branch
                  %595 = sbr.rel target = $region92
                $region97: #{tpu_custom_call.1} parent=89 // loop_exit
                  _
                %s615 = sshrl.u32 %s533, 1
                %s616 = sand.u32 %s533, 1
                %s617 = smul.u32 %s615, 2
                %s618 = smul.u32 8, %s617
                %s619 = scalar_lea.vmem %s526, %s618 [#allocation2]
                %s620 = smul.u32 8, %s617
                %s621 = scalar_lea.vmem %s537, %s620
                // While loop
                $region98: #{tpu_custom_call.1} parent=89 // loop_pre_header
                  _
                $region99: #{tpu_custom_call.1} parent=89 // loop_header
                  %s623 = sphi 0, %s625
                  %p624 = scmp.ge.s32.totalorder %s623, %s616
                  %s628 = sphi 0, %s635
                  %s629 = sphi %s619, %s638
                  %s630 = sphi %s621, %s639
                $region100: #{tpu_custom_call.1} parent=89 // loop_header_branch
                  %627 = sbr.rel (%p624) target = $region104
                $region101: #{tpu_custom_call.1} parent=89 // loop_body
                  %v631 = vld [vmem:[%s629] sm:$0xff]
                  %632 = vst [vmem:[%s630] sm:$0xff] %v631
                  %s633 = sadd.s32 1, %s628
                  %p634 = scmp.ge.s32.totalorder %s633, %s616
                  %s635 = scalar_select %p634, 0, %s633
                  %s636 = smul.u32 %s635, 8
                  %s637 = smul.u32 %s635, 8
                  %s638 = scalar_lea.vmem %s619, %s636 [#allocation2]
                  %s639 = scalar_lea.vmem %s621, %s637
                $region102: #{tpu_custom_call.1} parent=89 // loop_footer
                  %s625 = sadd.s32 %s623, 1
                $region103: #{tpu_custom_call.1} parent=89 // loop_footer_branch
                  %622 = sbr.rel target = $region99
                $region104: #{tpu_custom_call.1} parent=89 // loop_exit
                  _
              $region90: #{tpu_custom_call.1} parent=67 // pred_fallthru
                _
              // Predicated region
              $region105: #{tpu_custom_call.1} parent=67 // pred_check
                _
              $region106: #{tpu_custom_call.1} parent=67 // pred_check_branch
                %641 = sbr.rel target = $region108
              $region107: #{tpu_custom_call.1} parent=67 // pred_region
                _
              $region108: #{tpu_custom_call.1} parent=67 // pred_fallthru
                _
            $region68: #{tpu_custom_call.1} parent=63 // pred_fallthru
              _
            // Predicated region
            $region69: #{tpu_custom_call.1} parent=63 // pred_check
              _
            $region70: #{tpu_custom_call.1} parent=63 // pred_check_branch
              %544 = sbr.rel target = $region72
            $region71: #{tpu_custom_call.1} parent=63 // pred_region
              %s546 = sshrl.u32 %s533, 1
              // While loop
              $region73: #{tpu_custom_call.1} parent=71 // loop_pre_header
                _
              $region74: #{tpu_custom_call.1} parent=71 // loop_header
                %s548 = sphi 0, %s550
                %p549 = scmp.ge.s32.totalorder %s548, %s546
                %s553 = sphi 0, %s562
                %s554 = sphi %s526, %s565
                %s555 = sphi %s537, %s566
              $region75: #{tpu_custom_call.1} parent=71 // loop_header_branch
                %552 = sbr.rel (%p549) target = $region79
              $region76: #{tpu_custom_call.1} parent=71 // loop_body
                %v556 = vld [vmem:[%s554] sm:$0xff]
                %557 = vst [vmem:[%s555] sm:$0xff] %v556
                %v558 = vld [vmem:[%s554 + $0x8] sm:$0xff]
                %559 = vst [vmem:[%s555 + $0x8] sm:$0xff] %v558
                %s560 = sadd.s32 1, %s553
                %p561 = scmp.ge.s32.totalorder %s560, %s546
                %s562 = scalar_select %p561, 0, %s560
                %s563 = smul.u32 %s562, 16
                %s564 = smul.u32 %s562, 16
                %s565 = scalar_lea.vmem %s526, %s563 [#allocation2]
                %s566 = scalar_lea.vmem %s537, %s564
              $region77: #{tpu_custom_call.1} parent=71 // loop_footer
                %s550 = sadd.s32 %s548, 1
              $region78: #{tpu_custom_call.1} parent=71 // loop_footer_branch
                %547 = sbr.rel target = $region74
              $region79: #{tpu_custom_call.1} parent=71 // loop_exit
                _
              %s567 = sshrl.u32 %s533, 1
              %s568 = sand.u32 %s533, 1
              %s569 = smul.u32 %s567, 2
              %s570 = smul.u32 8, %s569
              %s571 = scalar_lea.vmem %s526, %s570 [#allocation2]
              %s572 = smul.u32 8, %s569
              %s573 = scalar_lea.vmem %s537, %s572
              // While loop
              $region80: #{tpu_custom_call.1} parent=71 // loop_pre_header
                _
              $region81: #{tpu_custom_call.1} parent=71 // loop_header
                %s575 = sphi 0, %s577
                %p576 = scmp.ge.s32.totalorder %s575, %s568
                %s580 = sphi 0, %s587
                %s581 = sphi %s571, %s590
                %s582 = sphi %s573, %s591
              $region82: #{tpu_custom_call.1} parent=71 // loop_header_branch
                %579 = sbr.rel (%p576) target = $region86
              $region83: #{tpu_custom_call.1} parent=71 // loop_body
                %v583 = vld [vmem:[%s581] sm:$0xff]
                %584 = vst [vmem:[%s582] sm:$0xff] %v583
                %s585 = sadd.s32 1, %s580
                %p586 = scmp.ge.s32.totalorder %s585, %s568
                %s587 = scalar_select %p586, 0, %s585
                %s588 = smul.u32 %s587, 8
                %s589 = smul.u32 %s587, 8
                %s590 = scalar_lea.vmem %s571, %s588 [#allocation2]
                %s591 = scalar_lea.vmem %s573, %s589
              $region84: #{tpu_custom_call.1} parent=71 // loop_footer
                %s577 = sadd.s32 %s575, 1
              $region85: #{tpu_custom_call.1} parent=71 // loop_footer_branch
                %574 = sbr.rel target = $region81
              $region86: #{tpu_custom_call.1} parent=71 // loop_exit
                _
            $region72: #{tpu_custom_call.1} parent=63 // pred_fallthru
              _
          $region64: #{tpu_custom_call.1} parent=59 // pred_fallthru
            _
          %642 = vnop
        $region60: #{tpu_custom_call.1} parent=55 // pred_fallthru
          _
      $region56: #{tpu_custom_call.1} parent=5 // pred_fallthru
        _
      %p643 = scmp.le.s32.totalorder 2, %s15
      // Predicated region
      $region109: #{tpu_custom_call.1} parent=5 // pred_check
        %p644 = pneg %p643
      $region110: #{tpu_custom_call.1} parent=5 // pred_check_branch
        %646 = sbr.rel (%p644) target = $region112
      $region111: #{tpu_custom_call.1} parent=5 // pred_region
        %s647 = ssub.s32 %s15, 2
        // Predicated region
        $region113: #{tpu_custom_call.1} parent=111 // pred_check
          %p648 = pneg %p248
        $region114: #{tpu_custom_call.1} parent=111 // pred_check_branch
          %650 = sbr.rel (%p648) target = $region116
        $region115: #{tpu_custom_call.1} parent=111 // pred_region
          %s651 = sand.u32 %s233, 1
          %s652 = sand.u32 %s233, 1
          %s653 = smul.addr %s652, 16
          %s654 = scalar_lea.vmem [#allocation2], %s653
        $region116: #{tpu_custom_call.1} parent=111 // pred_fallthru
          _
      $region112: #{tpu_custom_call.1} parent=5 // pred_fallthru
        _
    $region6: #{tpu_custom_call.1} parent=1 // loop_footer
      %s19 = sadd.s32 1, %s15
    $region7: #{tpu_custom_call.1} parent=1 // loop_footer_branch
      %14 = sbr.rel target = $region3
    $region8: #{tpu_custom_call.1} parent=1 // loop_exit
      _

</llo_original>
